<compile_context>
chip_gen: v6e
topology: v6e:2x2x1
jax: 0.10.0
libtpu: 0.0.40
codegen_flags: <defaults>
</compile_context>

<pallas_src>
import functools

import jax
import jax.numpy as jnp
from jax.experimental import pallas as pl
from jax.experimental.pallas import tpu as pltpu

LANE = 128      # fast (lane) axis granule
SUBLANE = 8     # slow (sublane) axis granule


def _round_up(x, m):
    return (x + m - 1) // m * m


def qnet_kernel(x_ref, w1_ref, b1_ref, w2_ref, b2_ref, o_ref):
    # linear1 + ReLU: MXU matmul with f32 accumulation; bias add + relu on VPU.
    h = jnp.dot(x_ref[...], w1_ref[...], preferred_element_type=jnp.float32)
    h = jnp.maximum(h + b1_ref[...], 0.0)             # (TB, HID_P) + (1, HID_P)
    # linear2 (cast only at the MXU boundary; f32 path -> no-op cast).
    y = jnp.dot(h.astype(w2_ref.dtype), w2_ref[...],
                preferred_element_type=jnp.float32)
    o_ref[...] = (y + b2_ref[...]).astype(o_ref.dtype)


@functools.partial(jax.jit, static_argnames=("batch_tile",))
def linear_qnet_forward(x, w1, b1, w2, b2, *, batch_tile=512):
    """relu(x @ w1 + b1) @ w2 + b2 with lane-dense padding and a batch grid."""
    squeeze_batch = (x.ndim == 1)          # support single-state inference
    if squeeze_batch:
        x = x[None, :]

    B, IN = x.shape
    HID = w1.shape[1]
    OUT = w2.shape[1]

    # Lane-dense padded feature dims.
    IN_P = _round_up(IN, LANE)
    HID_P = _round_up(HID, LANE)
    OUT_P = _round_up(OUT, LANE)

    # Batch tile: multiple of the 8-row sublane granule, capped at batch_tile.
    TB = min(batch_tile, _round_up(B, SUBLANE))
    TB = _round_up(TB, SUBLANE)
    B_P = _round_up(B, TB)

    dt = x.dtype
    # Zero-padding (exact zeros -> padded rows/cols contribute nothing).
    # NOTE: in a real training loop, pad the params once at init instead of
    # per call; done here to keep the original (x, w1, b1, w2, b2) signature.
    xp = jnp.zeros((B_P, IN_P), dt).at[:B, :IN].set(x)
    w1p = jnp.zeros((IN_P, HID_P), w1.dtype).at[:IN, :HID].set(w1)
    b1p = jnp.zeros((1, HID_P), b1.dtype).at[:, :HID].set(b1.reshape(1, HID))
    w2p = jnp.zeros((HID_P, OUT_P), w2.dtype).at[:HID, :OUT].set(w2)
    b2p = jnp.zeros((1, OUT_P), b2.dtype).at[:, :OUT].set(b2.reshape(1, OUT))

    grid = (pl.cdiv(B_P, TB),)
    vmem = pltpu.MemorySpace.VMEM

    out_padded = pl.pallas_call(
        qnet_kernel,
        out_shape=jax.ShapeDtypeStruct((B_P, OUT_P), dt),
        grid=grid,
        in_specs=[
            # x: tiled along batch, auto double-buffered.
            pl.BlockSpec((TB, IN_P), lambda i: (i, 0), memory_space=vmem),
            # weights / biases: constant index_map -> VMEM-resident, never refetched.
            pl.BlockSpec((IN_P, HID_P), lambda i: (0, 0), memory_space=vmem),
            pl.BlockSpec((1, HID_P), lambda i: (0, 0), memory_space=vmem),
            pl.BlockSpec((HID_P, OUT_P), lambda i: (0, 0), memory_space=vmem),
            pl.BlockSpec((1, OUT_P), lambda i: (0, 0), memory_space=vmem),
        ],
        out_specs=pl.BlockSpec((TB, OUT_P), lambda i: (i, 0), memory_space=vmem),
        compiler_params=pltpu.CompilerParams(
            dimension_semantics=("parallel",),   # shards batch across v7x's 2 TCs
            vmem_limit_bytes=32 * 1024 * 1024,
        ),
    )(xp, w1p, b1p, w2p, b2p)

    # Strip batch / output padding.
    out = out_padded[:B, :OUT]
    if squeeze_batch:
        out = out[0]
    return out


def init_params(key, input_units, hidden_units, output_units, dtype=jnp.float32):
    # Deterministic PyTorch-style init: U(-1/sqrt(fan_in), 1/sqrt(fan_in)).
    k1, k2, k3, k4 = jax.random.split(key, 4)
    bound1 = 1.0 / jnp.sqrt(jnp.asarray(input_units, dtype))
    bound2 = 1.0 / jnp.sqrt(jnp.asarray(hidden_units, dtype))
    w1 = jax.random.uniform(k1, (input_units, hidden_units), dtype, -bound1, bound1)
    b1 = jax.random.uniform(k2, (1, hidden_units), dtype, -bound1, bound1)
    w2 = jax.random.uniform(k3, (hidden_units, output_units), dtype, -bound2, bound2)
    b2 = jax.random.uniform(k4, (1, output_units), dtype, -bound2, bound2)
    return w1, b1, w2, b2


# TODO(synk): Linear_QNet.save() (torch checkpoint I/O) is host-side and has no
# Pallas equivalent; omitted.

if __name__ == "__main__":
    # Classic RL-Snake config: 11 state features, 256 hidden units, 3 actions.
    input_units, hidden_units, output_units = 11, 256, 3

    key = jax.random.PRNGKey(0)
    kx, kp, kb = jax.random.split(key, 3)
    w1, b1, w2, b2 = init_params(kp, input_units, hidden_units, output_units)

    def ref_fn(x):
        return jnp.maximum(x @ w1 + b1, 0.0) @ w2 + b2

    ok = True

    # 1) Small batch (single grid step).
    x_small = jax.random.normal(kx, (8, input_units), jnp.float32)
    out_small = jax.block_until_ready(linear_qnet_forward(x_small, w1, b1, w2, b2))
    ok &= out_small.shape == (8, output_units)
    ok &= bool(jnp.allclose(out_small, ref_fn(x_small), atol=1e-4, rtol=1e-4))

    # 2) Larger batch exercising the tiled, double-buffered batch grid
    #    (the intended operating point: many replay-buffer states per call).
    x_big = jax.random.normal(kb, (1024, input_units), jnp.float32)
    out_big = jax.block_until_ready(linear_qnet_forward(x_big, w1, b1, w2, b2))
    ok &= out_big.shape == (1024, output_units)
    ok &= bool(jnp.allclose(out_big, ref_fn(x_big), atol=1e-4, rtol=1e-4))

    # 3) Single-state (1-D) inference path, as used when the agent acts.
    x_one = jax.random.normal(kx, (input_units,), jnp.float32)
    out_one = jax.block_until_ready(linear_qnet_forward(x_one, w1, b1, w2, b2))
    ok &= out_one.shape == (output_units,)
    ok &= bool(jnp.allclose(out_one, ref_fn(x_one[None, :])[0], atol=1e-4, rtol=1e-4))

    assert ok
    print("KERNEL_OK")
</pallas_src>

<mosaic_0001>
module attributes {stable_mosaic.version = 11 : i64} {
  func.func @qnet_kernel(%arg0: i32, %arg1: memref<8x128xf32, #tpu.memory_space<vmem>>, %arg2: memref<128x256xf32, #tpu.memory_space<vmem>>, %arg3: memref<1x256xf32, #tpu.memory_space<vmem>>, %arg4: memref<256x128xf32, #tpu.memory_space<vmem>>, %arg5: memref<1x128xf32, #tpu.memory_space<vmem>>, %arg6: memref<8x128xf32, #tpu.memory_space<vmem>>) attributes {dimension_semantics = [#tpu.dimension_semantics<parallel>], iteration_bounds = array<i64: 1>, scalar_prefetch = 0 : i64, scratch_operands = 0 : i64, tpu.core_type = #tpu.core_type<tc>, window_params = [{transform_indices = @transform_0, window_bounds = array<i64: 8, 128>}, {pipeline_mode = #tpu.pipeline_mode<synchronous>, transform_indices = @transform_1, window_bounds = array<i64: 128, 256>}, {pipeline_mode = #tpu.pipeline_mode<synchronous>, transform_indices = @transform_2, window_bounds = array<i64: 1, 256>}, {pipeline_mode = #tpu.pipeline_mode<synchronous>, transform_indices = @transform_3, window_bounds = array<i64: 256, 128>}, {pipeline_mode = #tpu.pipeline_mode<synchronous>, transform_indices = @transform_4, window_bounds = array<i64: 1, 128>}, {transform_indices = @transform_5, window_bounds = array<i64: 8, 128>}]} {
    %c0 = arith.constant 0 : index
    %c0_0 = arith.constant 0 : index
    %0 = vector.load %arg1[%c0, %c0_0] : memref<8x128xf32, #tpu.memory_space<vmem>>, vector<8x128xf32>
    %c0_1 = arith.constant 0 : index
    %c0_2 = arith.constant 0 : index
    %1 = vector.load %arg2[%c0_1, %c0_2] : memref<128x256xf32, #tpu.memory_space<vmem>>, vector<128x256xf32>
    %cst = arith.constant dense<0.000000e+00> : vector<8x256xf32>
    %2 = tpu.matmul %0, %1, %cst {dimension_numbers = #tpu.dot_dimension_numbers<[1], [0], [0], [1], [0, 0, 1, 1], [], []>} : vector<8x128xf32>, vector<128x256xf32>, vector<8x256xf32> -> vector<8x256xf32>
    %c0_3 = arith.constant 0 : index
    %c0_4 = arith.constant 0 : index
    %3 = vector.load %arg3[%c0_3, %c0_4] : memref<1x256xf32, #tpu.memory_space<vmem>>, vector<1x256xf32>
    %4 = vector.broadcast %3 : vector<1x256xf32> to vector<8x256xf32>
    %5 = arith.addf %2, %4 : vector<8x256xf32>
    %cst_5 = arith.constant 0.000000e+00 : f32
    %6 = vector.broadcast %cst_5 : f32 to vector<8x256xf32>
    %7 = arith.maximumf %5, %6 : vector<8x256xf32>
    %c0_6 = arith.constant 0 : index
    %c0_7 = arith.constant 0 : index
    %8 = vector.load %arg4[%c0_6, %c0_7] : memref<256x128xf32, #tpu.memory_space<vmem>>, vector<256x128xf32>
    %cst_8 = arith.constant dense<0.000000e+00> : vector<8x128xf32>
    %9 = tpu.matmul %7, %8, %cst_8 {dimension_numbers = #tpu.dot_dimension_numbers<[1], [0], [0], [1], [0, 0, 1, 1], [], []>} : vector<8x256xf32>, vector<256x128xf32>, vector<8x128xf32> -> vector<8x128xf32>
    %c0_9 = arith.constant 0 : index
    %c0_10 = arith.constant 0 : index
    %10 = vector.load %arg5[%c0_9, %c0_10] : memref<1x128xf32, #tpu.memory_space<vmem>>, vector<1x128xf32>
    %11 = vector.broadcast %10 : vector<1x128xf32> to vector<8x128xf32>
    %12 = arith.addf %9, %11 : vector<8x128xf32>
    %c0_11 = arith.constant 0 : index
    %c0_12 = arith.constant 0 : index
    %13 = vector.load %arg6[%c0_11, %c0_12] : memref<8x128xf32, #tpu.memory_space<vmem>>, vector<8x128xf32>
    tpu.vector_store %arg6[%c0_11, %c0_12], %12 {strides = array<i32>} : memref<8x128xf32, #tpu.memory_space<vmem>>, vector<8x128xf32>,
    return
  }
  func.func @transform_0(%arg0: i32) -> (i32, i32) {
    %c0_i32 = arith.constant 0 : i32
    %c0_i32_0 = arith.constant 0 : i32
    return %arg0, %c0_i32 : i32, i32
  }
  func.func @transform_1(%arg0: i32) -> (i32, i32) {
    %c0_i32 = arith.constant 0 : i32
    %c0_i32_0 = arith.constant 0 : i32
    %c0_i32_1 = arith.constant 0 : i32
    return %c0_i32, %c0_i32_0 : i32, i32
  }
  func.func @transform_2(%arg0: i32) -> (i32, i32) {
    %c0_i32 = arith.constant 0 : i32
    %c0_i32_0 = arith.constant 0 : i32
    %c0_i32_1 = arith.constant 0 : i32
    return %c0_i32, %c0_i32_0 : i32, i32
  }
  func.func @transform_3(%arg0: i32) -> (i32, i32) {
    %c0_i32 = arith.constant 0 : i32
    %c0_i32_0 = arith.constant 0 : i32
    %c0_i32_1 = arith.constant 0 : i32
    return %c0_i32, %c0_i32_0 : i32, i32
  }
  func.func @transform_4(%arg0: i32) -> (i32, i32) {
    %c0_i32 = arith.constant 0 : i32
    %c0_i32_0 = arith.constant 0 : i32
    %c0_i32_1 = arith.constant 0 : i32
    return %c0_i32, %c0_i32_0 : i32, i32
  }
  func.func @transform_5(%arg0: i32) -> (i32, i32) {
    %c0_i32 = arith.constant 0 : i32
    %c0_i32_0 = arith.constant 0 : i32
    return %arg0, %c0_i32 : i32, i32
  }
}

</mosaic_0001>

<llo_original>
// kernel: linear_qnet_forward.1
$region0: #{linear_qnet_forward.1}
  #allocation0 [shape = 'u32[]', space=smem, size = 0x4, offset = 0x4, fixed_abs, tag = 'smem constant byte address 0x4 - core index']
  #allocation1 [shape = 'u32[144,128]{1,0:T(1,128)}', space=vmem, size = 0x12000, scoped, tag = 'internal scratch']
  %s0 = inlined_call_operand.vmem [shape: f32[8,128], index: 0, kind: input, shape index: {}]
  %s1 = inlined_call_operand.vmem [shape: f32[128,256], index: 1, kind: input, shape index: {}]
  %s2 = inlined_call_operand.vmem [shape: f32[1,256], index: 2, kind: input, shape index: {}]
  %s3 = inlined_call_operand.vmem [shape: f32[256,128], index: 3, kind: input, shape index: {}]
  %s4 = inlined_call_operand.vmem [shape: f32[1,128], index: 4, kind: input, shape index: {}]
  %s5 = inlined_call_operand.vmem [shape: f32[8,128], index: 5, kind: output, shape index: {}]
  %s6 = sld [smem:[#allocation0]]
  $region30: #{linear_qnet_forward.1} parent=0
    _
  %s8 = ssub.s32 1, %s6
  %s9 = scalar_select 0, %s8, %s6
  // Predicated region
  $region2: #{linear_qnet_forward.1} parent=0 // pred_check
    _
  $region3: #{linear_qnet_forward.1} parent=0 // pred_check_branch
    %11 = sbr.rel (0) target = $region5
  $region4: #{linear_qnet_forward.1} parent=0 // pred_region
    _
  $region5: #{linear_qnet_forward.1} parent=0 // pred_fallthru
    _
  // Predicated region
  $region6: #{linear_qnet_forward.1} parent=0 // pred_check
    _
  $region7: #{linear_qnet_forward.1} parent=0 // pred_check_branch
    %13 = sbr.rel (0) target = $region9
  $region8: #{linear_qnet_forward.1} parent=0 // pred_region
    _
  $region9: #{linear_qnet_forward.1} parent=0 // pred_fallthru
    _
  // Predicated region
  $region10: #{linear_qnet_forward.1} parent=0 // pred_check
    _
  $region11: #{linear_qnet_forward.1} parent=0 // pred_check_branch
    %15 = sbr.rel (0) target = $region13
  $region12: #{linear_qnet_forward.1} parent=0 // pred_region
    _
  $region13: #{linear_qnet_forward.1} parent=0 // pred_fallthru
    _
  // Predicated region
  $region14: #{linear_qnet_forward.1} parent=0 // pred_check
    _
  $region15: #{linear_qnet_forward.1} parent=0 // pred_check_branch
    %17 = sbr.rel (0) target = $region17
  $region16: #{linear_qnet_forward.1} parent=0 // pred_region
    _
  $region17: #{linear_qnet_forward.1} parent=0 // pred_fallthru
    _
  // Predicated region
  $region18: #{linear_qnet_forward.1} parent=0 // pred_check
    _
  $region19: #{linear_qnet_forward.1} parent=0 // pred_check_branch
    %19 = sbr.rel (0) target = $region21
  $region20: #{linear_qnet_forward.1} parent=0 // pred_region
    _
  $region21: #{linear_qnet_forward.1} parent=0 // pred_fallthru
    _
  %v20 = vld [vmem:[%s0] sm:$0xff]
  %v21 = vld [vmem:[%s1] sm:$0xff]
  %v22 = vld [vmem:[%s1 + $0x8] sm:$0xff]
  %v23 = vld [vmem:[%s1 + $0x10] sm:$0xff]
  %v24 = vld [vmem:[%s1 + $0x18] sm:$0xff]
  %v25 = vld [vmem:[%s1 + $0x20] sm:$0xff]
  %v26 = vld [vmem:[%s1 + $0x28] sm:$0xff]
  %v27 = vld [vmem:[%s1 + $0x30] sm:$0xff]
  %v28 = vld [vmem:[%s1 + $0x38] sm:$0xff]
  %v29 = vld [vmem:[%s1 + $0x40] sm:$0xff]
  %v30 = vld [vmem:[%s1 + $0x48] sm:$0xff]
  %v31 = vld [vmem:[%s1 + $0x50] sm:$0xff]
  %v32 = vld [vmem:[%s1 + $0x58] sm:$0xff]
  %v33 = vld [vmem:[%s1 + $0x60] sm:$0xff]
  %v34 = vld [vmem:[%s1 + $0x68] sm:$0xff]
  %v35 = vld [vmem:[%s1 + $0x70] sm:$0xff]
  %v36 = vld [vmem:[%s1 + $0x78] sm:$0xff]
  %v37 = vld [vmem:[%s1 + $0x80] sm:$0xff]
  %v38 = vld [vmem:[%s1 + $0x88] sm:$0xff]
  %v39 = vld [vmem:[%s1 + $0x90] sm:$0xff]
  %v40 = vld [vmem:[%s1 + $0x98] sm:$0xff]
  %v41 = vld [vmem:[%s1 + $0xa0] sm:$0xff]
  %v42 = vld [vmem:[%s1 + $0xa8] sm:$0xff]
  %v43 = vld [vmem:[%s1 + $0xb0] sm:$0xff]
  %v44 = vld [vmem:[%s1 + $0xb8] sm:$0xff]
  %v45 = vld [vmem:[%s1 + $0xc0] sm:$0xff]
  %v46 = vld [vmem:[%s1 + $0xc8] sm:$0xff]
  %v47 = vld [vmem:[%s1 + $0xd0] sm:$0xff]
  %v48 = vld [vmem:[%s1 + $0xd8] sm:$0xff]
  %v49 = vld [vmem:[%s1 + $0xe0] sm:$0xff]
  %v50 = vld [vmem:[%s1 + $0xe8] sm:$0xff]
  %v51 = vld [vmem:[%s1 + $0xf0] sm:$0xff]
  %v52 = vld [vmem:[%s1 + $0xf8] sm:$0xff]
  %v53 = vld [vmem:[%s2] sm:$0x3]
  %v55 = vlaneseq
  %v56 = vshrl.u32 %v55, 7
  %v57 = vsub.s32 0, %v56
  %v58 = vrot.slane %v53, %v57
  %v59 = vlaneseq
  %v60 = vshrl.u32 %v59, 7
  %v61 = vsub.s32 1, %v60
  %v62 = vrot.slane %v53, %v61
  %65 = vmatprep.subr.mxu0 %v52
  %66 = vmatpush1.msra.mxu0 %v51
  %67 = vmatprep.subr.mxu0 %v50
  %68 = vmatpush1.msra.mxu0 %v49
  %69 = vmatprep.subr.mxu0 %v48
  %70 = vmatpush1.msra.mxu0 %v47
  %71 = vmatprep.subr.mxu0 %v46
  %72 = vmatpush1.msra.mxu0 %v45
  %73 = vmatprep.subr.mxu0 %v44
  %74 = vmatpush1.msra.mxu0 %v43
  %75 = vmatprep.subr.mxu0 %v42
  %76 = vmatpush1.msra.mxu0 %v41
  %77 = vmatprep.subr.mxu0 %v40
  %78 = vmatpush1.msra.mxu0 %v39
  %79 = vmatprep.subr.mxu0 %v38
  %80 = vmatpush1.msra.mxu0 %v37
  %81 = vmatprep.subr.mxu0 %v36
  %82 = vmatpush1.msra.mxu0 %v35
  %83 = vmatprep.subr.mxu0 %v34
  %84 = vmatpush1.msra.mxu0 %v33
  %85 = vmatprep.subr.mxu0 %v32
  %86 = vmatpush1.msra.mxu0 %v31
  %87 = vmatprep.subr.mxu0 %v30
  %88 = vmatpush1.msra.mxu0 %v29
  %89 = vmatprep.subr.mxu0 %v28
  %90 = vmatpush1.msra.mxu0 %v27
  %91 = vmatprep.subr.mxu0 %v26
  %92 = vmatpush1.msra.mxu0 %v25
  %93 = vmatprep.subr.mxu0 %v24
  %94 = vmatpush1.msra.mxu0 %v23
  %95 = vmatprep.subr.mxu0 %v22
  %96 = vmatpush1.msra.mxu0 %v21
  %97 = vmatprep.subr.mxu0 0.0
  %98 = vmatpush2.msra.mxu0 0.0
  %99 = vmatprep.subr.mxu0 0.0
  %100 = vmatpush2.msra.mxu0 0.0
  %101 = vmatprep.subr.mxu0 0.0
  %102 = vmatpush2.msra.mxu0 0.0
  %103 = vmatprep.subr.mxu0 0.0
  %104 = vmatpush2.msra.mxu0 0.0
  %105 = vmatprep.subr.mxu0 0.0
  %106 = vmatpush2.msra.mxu0 0.0
  %107 = vmatprep.subr.mxu0 0.0
  %108 = vmatpush2.msra.mxu0 0.0
  %109 = vmatprep.subr.mxu0 0.0
  %110 = vmatpush2.msra.mxu0 0.0
  %111 = vmatprep.subr.mxu0 0.0
  %112 = vmatpush2.msra.mxu0 0.0
  %113 = vmatprep.subr.mxu0 0.0
  %114 = vmatpush2.msra.mxu0 0.0
  %115 = vmatprep.subr.mxu0 0.0
  %116 = vmatpush2.msra.mxu0 0.0
  %117 = vmatprep.subr.mxu0 0.0
  %118 = vmatpush2.msra.mxu0 0.0
  %119 = vmatprep.subr.mxu0 0.0
  %120 = vmatpush2.msra.mxu0 0.0
  %121 = vmatprep.subr.mxu0 0.0
  %122 = vmatpush2.msra.mxu0 0.0
  %123 = vmatprep.subr.mxu0 0.0
  %124 = vmatpush2.msra.mxu0 0.0
  %125 = vmatprep.subr.mxu0 0.0
  %126 = vmatpush2.msra.mxu0 0.0
  %127 = vmatprep.subr.mxu0 0.0
  %128 = vmatpush2.msra.mxu0 0.0
  %129 = vmatprep.mubr.f32.mxu0 0.0
  %130 = vmatmul.mubr.f32.gmra.mxu0 %v20
  %v131 = vpop.f32.mrf.mxu0
  %v132 = vadd.f32 %v58, %v131
  %v133 = vpop.f32.mrf.mxu0
  %v134 = vadd.f32 %v62, %v133
  %135 = vdwg.mxu0
  %v136 = vmax.f32 %v132, 0.0
  %v137 = vmax.f32 %v134, 0.0
  %v138 = vld [vmem:[%s3] sm:$0xff]
  %v139 = vld [vmem:[%s3 + $0x8] sm:$0xff]
  %v140 = vld [vmem:[%s3 + $0x10] sm:$0xff]
  %v141 = vld [vmem:[%s3 + $0x18] sm:$0xff]
  %v142 = vld [vmem:[%s3 + $0x20] sm:$0xff]
  %v143 = vld [vmem:[%s3 + $0x28] sm:$0xff]
  %v144 = vld [vmem:[%s3 + $0x30] sm:$0xff]
  %v145 = vld [vmem:[%s3 + $0x38] sm:$0xff]
  %v146 = vld [vmem:[%s3 + $0x40] sm:$0xff]
  %v147 = vld [vmem:[%s3 + $0x48] sm:$0xff]
  %v148 = vld [vmem:[%s3 + $0x50] sm:$0xff]
  %v149 = vld [vmem:[%s3 + $0x58] sm:$0xff]
  %v150 = vld [vmem:[%s3 + $0x60] sm:$0xff]
  %v151 = vld [vmem:[%s3 + $0x68] sm:$0xff]
  %v152 = vld [vmem:[%s3 + $0x70] sm:$0xff]
  %v153 = vld [vmem:[%s3 + $0x78] sm:$0xff]
  %v154 = vld [vmem:[%s3 + $0x80] sm:$0xff]
  %v155 = vld [vmem:[%s3 + $0x88] sm:$0xff]
  %v156 = vld [vmem:[%s3 + $0x90] sm:$0xff]
  %v157 = vld [vmem:[%s3 + $0x98] sm:$0xff]
  %v158 = vld [vmem:[%s3 + $0xa0] sm:$0xff]
  %v159 = vld [vmem:[%s3 + $0xa8] sm:$0xff]
  %v160 = vld [vmem:[%s3 + $0xb0] sm:$0xff]
  %v161 = vld [vmem:[%s3 + $0xb8] sm:$0xff]
  %v162 = vld [vmem:[%s3 + $0xc0] sm:$0xff]
  %v163 = vld [vmem:[%s3 + $0xc8] sm:$0xff]
  %v164 = vld [vmem:[%s3 + $0xd0] sm:$0xff]
  %v165 = vld [vmem:[%s3 + $0xd8] sm:$0xff]
  %v166 = vld [vmem:[%s3 + $0xe0] sm:$0xff]
  %v167 = vld [vmem:[%s3 + $0xe8] sm:$0xff]
  %v168 = vld [vmem:[%s3 + $0xf0] sm:$0xff]
  %v169 = vld [vmem:[%s3 + $0xf8] sm:$0xff]
  %v170 = vld [vmem:[%s4] sm:$0x1]
  %v172 = vlaneseq
  %v173 = vshrl.u32 %v172, 7
  %v174 = vsub.s32 0, %v173
  %v175 = vrot.slane %v170, %v174
  %177 = vmatprep.subr.mxu0 0.0
  %178 = vmatpush1.msra.mxu0 %v153
  %179 = vmatprep.subr.mxu0 0.0
  %180 = vmatpush1.msra.mxu0 %v152
  %181 = vmatprep.subr.mxu0 0.0
  %182 = vmatpush1.msra.mxu0 %v151
  %183 = vmatprep.subr.mxu0 0.0
  %184 = vmatpush1.msra.mxu0 %v150
  %185 = vmatprep.subr.mxu0 0.0
  %186 = vmatpush1.msra.mxu0 %v149
  %187 = vmatprep.subr.mxu0 0.0
  %188 = vmatpush1.msra.mxu0 %v148
  %189 = vmatprep.subr.mxu0 0.0
  %190 = vmatpush1.msra.mxu0 %v147
  %191 = vmatprep.subr.mxu0 0.0
  %192 = vmatpush1.msra.mxu0 %v146
  %193 = vmatprep.subr.mxu0 0.0
  %194 = vmatpush1.msra.mxu0 %v145
  %195 = vmatprep.subr.mxu0 0.0
  %196 = vmatpush1.msra.mxu0 %v144
  %197 = vmatprep.subr.mxu0 0.0
  %198 = vmatpush1.msra.mxu0 %v143
  %199 = vmatprep.subr.mxu0 0.0
  %200 = vmatpush1.msra.mxu0 %v142
  %201 = vmatprep.subr.mxu0 0.0
  %202 = vmatpush1.msra.mxu0 %v141
  %203 = vmatprep.subr.mxu0 0.0
  %204 = vmatpush1.msra.mxu0 %v140
  %205 = vmatprep.subr.mxu0 0.0
  %206 = vmatpush1.msra.mxu0 %v139
  %207 = vmatprep.subr.mxu0 0.0
  %208 = vmatpush1.msra.mxu0 %v138
  %209 = vmatprep.subr.mxu0 0.0
  %210 = vmatpush2.msra.mxu0 %v169
  %211 = vmatprep.subr.mxu0 0.0
  %212 = vmatpush2.msra.mxu0 %v168
  %213 = vmatprep.subr.mxu0 0.0
  %214 = vmatpush2.msra.mxu0 %v167
  %215 = vmatprep.subr.mxu0 0.0
  %216 = vmatpush2.msra.mxu0 %v166
  %217 = vmatprep.subr.mxu0 0.0
  %218 = vmatpush2.msra.mxu0 %v165
  %219 = vmatprep.subr.mxu0 0.0
  %220 = vmatpush2.msra.mxu0 %v164
  %221 = vmatprep.subr.mxu0 0.0
  %222 = vmatpush2.msra.mxu0 %v163
  %223 = vmatprep.subr.mxu0 0.0
  %224 = vmatpush2.msra.mxu0 %v162
  %225 = vmatprep.subr.mxu0 0.0
  %226 = vmatpush2.msra.mxu0 %v161
  %227 = vmatprep.subr.mxu0 0.0
  %228 = vmatpush2.msra.mxu0 %v160
  %229 = vmatprep.subr.mxu0 0.0
  %230 = vmatpush2.msra.mxu0 %v159
  %231 = vmatprep.subr.mxu0 0.0
  %232 = vmatpush2.msra.mxu0 %v158
  %233 = vmatprep.subr.mxu0 0.0
  %234 = vmatpush2.msra.mxu0 %v157
  %235 = vmatprep.subr.mxu0 0.0
  %236 = vmatpush2.msra.mxu0 %v156
  %237 = vmatprep.subr.mxu0 0.0
  %238 = vmatpush2.msra.mxu0 %v155
  %239 = vmatprep.subr.mxu0 0.0
  %240 = vmatpush2.msra.mxu0 %v154
  %241 = vmatprep.mubr.f32.mxu0 %v137
  %242 = vmatmul.mubr.f32.gmra.mxu0 %v136
  %v243 = vpop.f32.mrf.mxu0
  %v244 = vadd.f32 %v175, %v243
  %v245 = vpop.f32.mrf.mxu0
  %246 = vdwg.mxu0
  %247 = vst [vmem:[%s5] sm:$0xff] %v244
  // Predicated region
  $region22: #{linear_qnet_forward.1} parent=0 // pred_check
    _
  $region23: #{linear_qnet_forward.1} parent=0 // pred_check_branch
    %249 = sbr.rel (0) target = $region25
  $region24: #{linear_qnet_forward.1} parent=0 // pred_region
    _
  $region25: #{linear_qnet_forward.1} parent=0 // pred_fallthru
    _
  // Predicated region
  $region26: #{linear_qnet_forward.1} parent=0 // pred_check
    _
  $region27: #{linear_qnet_forward.1} parent=0 // pred_check_branch
    %251 = sbr.rel (0) target = $region29
  $region28: #{linear_qnet_forward.1} parent=0 // pred_region
    _
  $region29: #{linear_qnet_forward.1} parent=0 // pred_fallthru
    _

</llo_original>
